<compile_context>
chip_gen: v7x
topology: tpu7x:2x2x1
jax: 0.10.0
libtpu: 0.0.40
codegen_flags: <defaults>
</compile_context>

<pallas_src>
import functools

import jax
import jax.numpy as jnp
from jax.experimental import pallas as pl
from jax.experimental.pallas import tpu as pltpu

LANES = 128
MAX_ROW_BLOCK = 8192  # 8192 * 128 * 4 B = 4 MiB per f32 stream per grid step


def _round_up(x: int, m: int) -> int:
    return ((x + m - 1) // m) * m


def _smooth_bce_kernel(p_ref, t_ref, o_ref, *, label_smoothing: float):
    """Elementwise smoothed-BCE on one (row_block, 128) tile. f32 math on-chip."""
    eps = 1e-12
    p = p_ref[...].astype(jnp.float32)
    t_raw = t_ref[...].astype(jnp.float32)

    # torch.clamp(inputs, eps, 1 - eps).  (1 - eps == 1.0 in f32; the -100 log
    # clamps below keep log(1-p) finite.  Keep the min so p > 1 never reaches
    # log() as a negative argument.)
    p = jnp.minimum(jnp.maximum(p, eps), 1.0 - eps)

    # mask: clip(targets, 0, 2) == 2  <=>  targets >= 2 for finite targets
    # (the ignore label).  Documented equivalence -- keep in sync with PyTorch.
    mask = t_raw >= 2.0

    # targets = clip(targets, 0, 1) * (1 - ls) + 0.5 * ls
    t = jnp.clip(t_raw, 0.0, 1.0) * (1.0 - label_smoothing) + 0.5 * label_smoothing

    # F.binary_cross_entropy(reduction='none'):
    #   loss = -(t*log(p) + (1-t)*log(1-p)), each log term clamped at -100.
    log_p = jnp.maximum(jnp.log(p), -100.0)
    log_1mp = jnp.maximum(jnp.log(1.0 - p), -100.0)
    # Algebraically identical, fewer VALU ops: -(t*lp + (1-t)*l1) = t*(l1-lp) - l1
    loss = t * (log_1mp - log_p) - log_1mp

    # loss[mask] = 0
    o_ref[...] = jnp.where(mask, 0.0, loss).astype(o_ref.dtype)


def _reference(inputs, targets, label_smoothing=0.05):
    """Pure-JAX reference mirroring the PyTorch module (f32 math)."""
    eps = 1e-12
    p = jnp.clip(inputs.astype(jnp.float32), eps, 1.0 - eps)
    t_raw = targets.astype(jnp.float32)
    mask = jnp.clip(t_raw, 0.0, 2.0) == 2.0
    t = jnp.clip(t_raw, 0.0, 1.0)
    t = t * (1.0 - label_smoothing) + 0.5 * label_smoothing
    loss = -(t * jnp.maximum(jnp.log(p), -100.0)
             + (1.0 - t) * jnp.maximum(jnp.log(1.0 - p), -100.0))
    return jnp.where(mask, 0.0, loss)


def smooth_binary_ce_loss(inputs, targets, label_smoothing=0.05,
                          *, min_pallas_elements=65536):
    """Pallas-backed equivalent of SmoothBinaryCELoss.forward (reduction='none')."""
    if not 0 <= label_smoothing < 1:
        raise ValueError("Label smoothing must be in [0,1)")
    assert inputs.shape == targets.shape

    orig_shape = inputs.shape
    out_dtype = inputs.dtype
    n = int(inputs.size)

    if n == 0:
        return jnp.zeros(orig_shape, out_dtype)

    # Small-input bypass: a single-step grid pays launch + DMA round trip that
    # XLA's fused elementwise path avoids.
    if n < min_pallas_elements:
        return _reference(inputs, targets, label_smoothing).astype(out_dtype)

    # Keep native dtypes (bf16 / int8 / ...) -- the kernel upcasts to f32.
    p_flat = jnp.ravel(inputs)
    t_flat = jnp.ravel(targets)

    needs_pad = (n % LANES) != 0
    if needs_pad:
        # Only the lane-tail case pays for a pad/slice.  Pad targets with the
        # ignore label (2) so padded loss elements are 0; they are sliced off.
        rows = _round_up(pl.cdiv(n, LANES), 8)
        padded = rows * LANES
        p_flat = jnp.pad(p_flat, (0, padded - n))
        t_flat = jnp.pad(t_flat, (0, padded - n), constant_values=2)
    else:
        # 128-aligned: no pad, no output slice.  A partial final block (rows not
        # a multiple of row_block) is masked by Pallas (OOB reads discarded,
        # OOB writes masked).  No reduction over those lanes exists.
        rows = n // LANES

    p2d = p_flat.reshape(rows, LANES)
    t2d = t_flat.reshape(rows, LANES)

    # Block sizing: big blocks to amortize per-step overhead, but always >= 2
    # grid steps when there is more than one sublane-tile of work so the
    # "parallel" grid axis spans both v7x TensorCores.
    if rows <= 8:
        row_block = rows                      # full-array block (allowed)
    elif rows <= 2 * MAX_ROW_BLOCK:
        row_block = min(MAX_ROW_BLOCK, _round_up(pl.cdiv(rows, 2), 8))
    else:
        row_block = MAX_ROW_BLOCK
    grid = pl.cdiv(rows, row_block)

    itemsizes = (p2d.dtype.itemsize + t2d.dtype.itemsize
                 + jnp.dtype(out_dtype).itemsize)
    # Double-buffered footprint of the three streams + headroom.
    vmem_limit = min(2 * row_block * LANES * itemsizes + (8 << 20), 100 << 20)

    kernel = functools.partial(_smooth_bce_kernel,
                               label_smoothing=float(label_smoothing))

    out2d = pl.pallas_call(
        kernel,
        out_shape=jax.ShapeDtypeStruct((rows, LANES), out_dtype),
        grid_spec=pltpu.PrefetchScalarGridSpec(
            num_scalar_prefetch=0,
            grid=(grid,),
            in_specs=[
                pl.BlockSpec((row_block, LANES), lambda i: (i, 0)),
                pl.BlockSpec((row_block, LANES), lambda i: (i, 0)),
            ],
            out_specs=pl.BlockSpec((row_block, LANES), lambda i: (i, 0)),
        ),
        compiler_params=pltpu.CompilerParams(
            dimension_semantics=("parallel",),
            vmem_limit_bytes=int(vmem_limit)),
        cost_estimate=pl.CostEstimate(
            flops=10 * rows * LANES,
            transcendentals=2 * rows * LANES,
            bytes_accessed=rows * LANES * itemsizes),
    )(p2d, t2d)

    if needs_pad:
        return out2d.reshape(-1)[:n].reshape(orig_shape)
    return out2d.reshape(orig_shape)


if __name__ == "__main__":
    key = jax.random.PRNGKey(0)
    k1, k2, k3, k4 = jax.random.split(key, 4)

    # --- test 1: NCHW f32, 128-aligned -> no-pad kernel path, grid >= 2 -------
    B, C, H, W = 2, 4, 16, 16
    inputs = jax.random.uniform(k1, (B, C, H, W), dtype=jnp.float32,
                                minval=0.0, maxval=1.0)
    targets = jax.random.randint(k2, (B, C, H, W), 0, 3).astype(jnp.float32)

    loss = jax.block_until_ready(
        smooth_binary_ce_loss(inputs, targets, label_smoothing=0.05,
                              min_pallas_elements=0))
    ref = _reference(inputs, targets, label_smoothing=0.05)
    assert loss.shape == inputs.shape
    assert loss.dtype == inputs.dtype
    assert jnp.allclose(loss, ref, atol=1e-5, rtol=1e-5), "f32 aligned mismatch"

    # --- test 2: ragged size + int8 targets -> pad path, narrow target stream -
    shp = (3, 5, 7)  # 105 elements, not a multiple of 128
    inputs_r = jax.random.uniform(k3, shp, dtype=jnp.float32,
                                  minval=0.0, maxval=1.0)
    targets_r = jax.random.randint(k4, shp, 0, 3).astype(jnp.int8)
    loss_r = jax.block_until_ready(
        smooth_binary_ce_loss(inputs_r, targets_r, label_smoothing=0.05,
                              min_pallas_elements=0))
    ref_r = _reference(inputs_r, targets_r, label_smoothing=0.05)
    assert loss_r.shape == shp
    assert jnp.allclose(loss_r, ref_r, atol=1e-5, rtol=1e-5), "ragged mismatch"

    # --- test 3: bf16 inputs/targets stream natively, f32 math in-kernel ------
    inputs_b = inputs.astype(jnp.bfloat16)
    targets_b = targets.astype(jnp.bfloat16)
    loss_b = jax.block_until_ready(
        smooth_binary_ce_loss(inputs_b, targets_b, label_smoothing=0.05,
                              min_pallas_elements=0))
    ref_b = _reference(inputs_b, targets_b, label_smoothing=0.05)
    assert loss_b.dtype == jnp.bfloat16
    assert jnp.allclose(loss_b.astype(jnp.float32), ref_b,
                        atol=2e-1, rtol=2e-2), "bf16 mismatch"

    # --- test 4: small-input bypass (default threshold) ------------------------
    loss_s = jax.block_until_ready(
        smooth_binary_ce_loss(inputs, targets, label_smoothing=0.05))
    assert jnp.allclose(loss_s, ref, atol=1e-5, rtol=1e-5), "bypass mismatch"

    print("KERNEL_OK")
</pallas_src>

<mosaic_0001>
module attributes {stable_mosaic.version = 11 : i64} {
  func.func @_smooth_bce_kernel(%arg0: i32, %arg1: memref<8x128xf32, #tpu.memory_space<vmem>>, %arg2: memref<8x128xf32, #tpu.memory_space<vmem>>, %arg3: memref<8x128xf32, #tpu.memory_space<vmem>>) attributes {dimension_semantics = [#tpu.dimension_semantics<parallel>], iteration_bounds = array<i64: 2>, scalar_prefetch = 0 : i64, scratch_operands = 0 : i64, tpu.core_type = #tpu.core_type<tc>, window_params = [{transform_indices = @transform_0, window_bounds = array<i64: 8, 128>}, {transform_indices = @transform_1, window_bounds = array<i64: 8, 128>}, {transform_indices = @transform_2, window_bounds = array<i64: 8, 128>}]} {
    %c0 = arith.constant 0 : index
    %c0_0 = arith.constant 0 : index
    %0 = vector.load %arg1[%c0, %c0_0] : memref<8x128xf32, #tpu.memory_space<vmem>>, vector<8x128xf32>
    %c0_1 = arith.constant 0 : index
    %c0_2 = arith.constant 0 : index
    %1 = vector.load %arg2[%c0_1, %c0_2] : memref<8x128xf32, #tpu.memory_space<vmem>>, vector<8x128xf32>
    %cst = arith.constant 9.99999996E-13 : f32
    %2 = vector.broadcast %cst : f32 to vector<8x128xf32>
    %3 = arith.maximumf %0, %2 : vector<8x128xf32>
    %cst_3 = arith.constant 1.000000e+00 : f32
    %4 = vector.broadcast %cst_3 : f32 to vector<8x128xf32>
    %5 = arith.minimumf %3, %4 : vector<8x128xf32>
    %cst_4 = arith.constant 2.000000e+00 : f32
    %6 = vector.broadcast %cst_4 : f32 to vector<8x128xf32>
    %7 = arith.cmpf oge, %1, %6 : vector<8x128xf32>
    %cst_5 = arith.constant 0.000000e+00 : f32
    %cst_6 = arith.constant 1.000000e+00 : f32
    %8 = vector.broadcast %cst_5 : f32 to vector<8x128xf32>
    %9 = arith.maximumf %8, %1 : vector<8x128xf32>
    %10 = vector.broadcast %cst_6 : f32 to vector<8x128xf32>
    %11 = arith.minimumf %10, %9 : vector<8x128xf32>
    %cst_7 = arith.constant 0.949999988 : f32
    %12 = vector.broadcast %cst_7 : f32 to vector<8x128xf32>
    %13 = arith.mulf %11, %12 : vector<8x128xf32>
    %cst_8 = arith.constant 2.500000e-02 : f32
    %14 = vector.broadcast %cst_8 : f32 to vector<8x128xf32>
    %15 = arith.addf %13, %14 : vector<8x128xf32>
    %16 = math.log %5 : vector<8x128xf32>
    %cst_9 = arith.constant -1.000000e+02 : f32
    %17 = vector.broadcast %cst_9 : f32 to vector<8x128xf32>
    %18 = arith.maximumf %16, %17 : vector<8x128xf32>
    %cst_10 = arith.constant 1.000000e+00 : f32
    %19 = vector.broadcast %cst_10 : f32 to vector<8x128xf32>
    %20 = arith.subf %19, %5 : vector<8x128xf32>
    %21 = math.log %20 : vector<8x128xf32>
    %cst_11 = arith.constant -1.000000e+02 : f32
    %22 = vector.broadcast %cst_11 : f32 to vector<8x128xf32>
    %23 = arith.maximumf %21, %22 : vector<8x128xf32>
    %24 = arith.subf %23, %18 : vector<8x128xf32>
    %25 = arith.mulf %15, %24 : vector<8x128xf32>
    %26 = arith.subf %25, %23 : vector<8x128xf32>
    %cst_12 = arith.constant 0.000000e+00 : f32
    %27 = vector.broadcast %cst_12 : f32 to vector<8x128xf32>
    %28 = arith.select %7, %27, %26 : vector<8x128xi1>, vector<8x128xf32>
    %c0_13 = arith.constant 0 : index
    %c0_14 = arith.constant 0 : index
    %29 = vector.load %arg3[%c0_13, %c0_14] : memref<8x128xf32, #tpu.memory_space<vmem>>, vector<8x128xf32>
    tpu.vector_store %arg3[%c0_13, %c0_14], %28 {strides = array<i32>} : memref<8x128xf32, #tpu.memory_space<vmem>>, vector<8x128xf32>,
    return
  }
  func.func @transform_0(%arg0: i32) -> (i32, i32) {
    %c0_i32 = arith.constant 0 : i32
    %c0_i32_0 = arith.constant 0 : i32
    return %arg0, %c0_i32 : i32, i32
  }
  func.func @transform_1(%arg0: i32) -> (i32, i32) {
    %c0_i32 = arith.constant 0 : i32
    %c0_i32_0 = arith.constant 0 : i32
    return %arg0, %c0_i32 : i32, i32
  }
  func.func @transform_2(%arg0: i32) -> (i32, i32) {
    %c0_i32 = arith.constant 0 : i32
    %c0_i32_0 = arith.constant 0 : i32
    return %arg0, %c0_i32 : i32, i32
  }
}

</mosaic_0001>

<llo_original>
// kernel: tpu_custom_call.1
$region0: #{tpu_custom_call.1}
  #allocation0 [shape = 'u32[]', space=smem, size = 0x4, offset = 0x4, fixed_abs, tag = 'smem constant byte address 0x4 - core index']
  #allocation1 [shape = 'u32[144,128]{1,0:T(1,128)}', space=vmem, size = 0x12000, scoped, tag = 'internal scratch']
  %s0 = inlined_call_operand.hbm [shape: f32[16,128], index: 0, kind: input, shape index: {}]
  %s1 = inlined_call_operand.hbm [shape: f32[16,128], index: 1, kind: input, shape index: {}]
  %s2 = inlined_call_operand.hbm [shape: f32[16,128], index: 2, kind: output, shape index: {}]
  %s3 = sld [smem:[#allocation0]]
  $region49: #{tpu_custom_call.1} parent=0
    _
  %s5 = ssub.s32 1, %s3
  %s6 = scalar_select 0, %s5, %s3
  $region1: #{tpu_custom_call.1} parent=0
    #allocation2 [shape = 'u8[8192]{0}', space=vmem, size = 0x2000, scoped, tag = 'input window, operand 0']
    #allocation3 [shape = 's32[2]{0}', space=sflag, size = 0x8, scoped, tag = 'scoped memory for tpu_custom_call.1']
    #allocation4 [shape = 's32[2]{0}', space=sflag, size = 0x8, scoped, tag = 'scoped memory for tpu_custom_call.1']
    #allocation5 [shape = 'u8[8192]{0}', space=vmem, size = 0x2000, scoped, tag = 'input window, operand 1']
    #allocation6 [shape = 's32[2]{0}', space=sflag, size = 0x8, scoped, tag = 'scoped memory for tpu_custom_call.1']
    #allocation7 [shape = 'u8[8192]{0}', space=vmem, size = 0x2000, scoped, tag = 'output window, operand 0']
    %7 = vsyncpa [#allocation3], 0
    %s8 = scalar_lea.sflag [#allocation3], 1
    %9 = vsyncpa %s8, 0
    %10 = vsyncpa [#allocation6], 0
    %s11 = scalar_lea.sflag [#allocation6], 1
    %12 = vsyncpa %s11, 0
    %13 = vsyncpa [#allocation4], 0
    %s14 = scalar_lea.sflag [#allocation4], 1
    %15 = vsyncpa %s14, 0
    loop: start=0, step=1, limit=4
    $region2: #{tpu_custom_call.1} parent=1 // loop_pre_header
      _
    $region3: #{tpu_custom_call.1} parent=1 // loop_header
      %s17 = sphi 0, %s21
      %p18 = scmp.ge.s32.totalorder %s17, 4
      %s27 = sphi 0, %s29
      %s30 = sphi 0, %s27
      %s31 = sphi 0, %s30
      %s47 = sphi 0, %s31
      %s53 = sphi 0, %s55
      %s56 = sphi 0, %s53
      %s57 = sphi 0, %s56
      %s73 = sphi 0, %s57
      %s79 = sphi 0, %s81
      %s82 = sphi 0, %s79
      %s83 = sphi 0, %s82
      %s99 = sphi 0, %s83
    $region4: #{tpu_custom_call.1} parent=1 // loop_header_branch
      %20 = sbr.rel (%p18) target = $region8
    $region5: #{tpu_custom_call.1} parent=1 // loop_body
      %s22 = ssub.s32 %s17, 1
      %s23 = ssub.s32 %s17, 2
      %s24 = sadd.s32 %s17, 1
      %s25 = ssub.s32 %s17, %s24
      %p26 = scmp.eq.s32.totalorder %s25, 0
      %s28 = sadd.s32 %s27, 1
      %s29 = scalar_select %p26, %s27, %s28
      %p32 = pneg %p26
      %p33 = scmp.eq.s32.totalorder %s17, 1
      %p34 = por %p32, %p33
      %p35 = scmp.ne.s32.totalorder %s27, %s30
      %p36 = scmp.eq.s32.totalorder %s17, 0
      %p37 = por %p35, %p36
      %p38 = scmp.ne.s32.totalorder %s27, %s30
      %p39 = scmp.eq.s32.totalorder %s22, 1
      %p40 = por %p38, %p39
      %p41 = scmp.ne.s32.totalorder %s30, %s31
      %p42 = scmp.eq.s32.totalorder %s22, 0
      %p43 = por %p41, %p42
      %p44 = scmp.ne.s32.totalorder %s30, %s31
      %p45 = scmp.eq.s32.totalorder %s23, 1
      %p46 = por %p44, %p45
      %p48 = scmp.ne.s32.totalorder %s31, %s47
      %p49 = scmp.eq.s32.totalorder %s23, 0
      %p50 = por %p48, %p49
      %s51 = ssub.s32 %s17, %s24
      %p52 = scmp.eq.s32.totalorder %s51, 0
      %s54 = sadd.s32 %s53, 1
      %s55 = scalar_select %p52, %s53, %s54
      %p58 = pneg %p52
      %p59 = scmp.eq.s32.totalorder %s17, 1
      %p60 = por %p58, %p59
      %p61 = scmp.ne.s32.totalorder %s53, %s56
      %p62 = scmp.eq.s32.totalorder %s17, 0
      %p63 = por %p61, %p62
      %p64 = scmp.ne.s32.totalorder %s53, %s56
      %p65 = scmp.eq.s32.totalorder %s22, 1
      %p66 = por %p64, %p65
      %p67 = scmp.ne.s32.totalorder %s56, %s57
      %p68 = scmp.eq.s32.totalorder %s22, 0
      %p69 = por %p67, %p68
      %p70 = scmp.ne.s32.totalorder %s56, %s57
      %p71 = scmp.eq.s32.totalorder %s23, 1
      %p72 = por %p70, %p71
      %p74 = scmp.ne.s32.totalorder %s57, %s73
      %p75 = scmp.eq.s32.totalorder %s23, 0
      %p76 = por %p74, %p75
      %s77 = ssub.s32 %s17, %s24
      %p78 = scmp.eq.s32.totalorder %s77, 0
      %s80 = sadd.s32 %s79, 1
      %s81 = scalar_select %p78, %s79, %s80
      %p84 = pneg %p78
      %p85 = scmp.eq.s32.totalorder %s17, 1
      %p86 = por %p84, %p85
      %p87 = scmp.ne.s32.totalorder %s79, %s82
      %p88 = scmp.eq.s32.totalorder %s17, 0
      %p89 = por %p87, %p88
      %p90 = scmp.ne.s32.totalorder %s79, %s82
      %p91 = scmp.eq.s32.totalorder %s22, 1
      %p92 = por %p90, %p91
      %p93 = scmp.ne.s32.totalorder %s82, %s83
      %p94 = scmp.eq.s32.totalorder %s22, 0
      %p95 = por %p93, %p94
      %p96 = scmp.ne.s32.totalorder %s82, %s83
      %p97 = scmp.eq.s32.totalorder %s23, 1
      %p98 = por %p96, %p97
      %p100 = scmp.ne.s32.totalorder %s83, %s99
      %p101 = scmp.eq.s32.totalorder %s23, 0
      %p102 = por %p100, %p101
      %p103 = scmp.le.s32.totalorder 1, %s17
      %p104 = scmp.lt.s32.totalorder %s17, 3
      %p105 = pnand %p103, %p104
      %p106 = pneg %p105
      // Predicated region
      $region9: #{tpu_custom_call.1} parent=5 // pred_check
        _
      $region10: #{tpu_custom_call.1} parent=5 // pred_check_branch
        %108 = sbr.rel (%p105) target = $region12
      $region11: #{tpu_custom_call.1} parent=5 // pred_region
        %s109 = ssub.s32 %s17, 1
      $region12: #{tpu_custom_call.1} parent=5 // pred_fallthru
        _
      %p110 = scmp.lt.s32.totalorder %s17, 2
      // Predicated region
      $region13: #{tpu_custom_call.1} parent=5 // pred_check
        %p111 = pneg %p110
      $region14: #{tpu_custom_call.1} parent=5 // pred_check_branch
        %113 = sbr.rel (%p111) target = $region16
      $region15: #{tpu_custom_call.1} parent=5 // pred_region
        // Predicated region
        $region17: #{tpu_custom_call.1} parent=15 // pred_check
          %p114 = pneg %p37
        $region18: #{tpu_custom_call.1} parent=15 // pred_check_branch
          %116 = sbr.rel (%p114) target = $region20
        $region19: #{tpu_custom_call.1} parent=15 // pred_region
          %s117 = sand.u32 %s27, 1
          %s118 = scalar_lea.sflag [#allocation3], %s117
          %s119 = sand.u32 %s27, 1
          %s120 = smul.addr %s119, 8
          %s121 = scalar_lea.vmem [#allocation2], %s120
          %s123 = ssub.s32 128, 128
          %124 = vsyncadd %s118, %s123
          %s125 = smul.addr %s17, 128
          %s126 = scalar_lea.hbm %s0, %s125
          %s128 = sshll.u32 %s121, 4
          %s129 = int_to_ptr.vmem [resolvable:$true] %s128
          %131 = dma.hbm_to_vmem [thread:$0]  %s126, 128, %s129, %s118
        $region20: #{tpu_custom_call.1} parent=15 // pred_fallthru
          _
        // Predicated region
        $region21: #{tpu_custom_call.1} parent=15 // pred_check
          %p132 = pneg %p63
        $region22: #{tpu_custom_call.1} parent=15 // pred_check_branch
          %134 = sbr.rel (%p132) target = $region24
        $region23: #{tpu_custom_call.1} parent=15 // pred_region
          %s135 = sand.u32 %s53, 1
          %s136 = scalar_lea.sflag [#allocation6], %s135
          %s137 = sand.u32 %s53, 1
          %s138 = smul.addr %s137, 8
          %s139 = scalar_lea.vmem [#allocation5], %s138
          %s141 = ssub.s32 128, 128
          %142 = vsyncadd %s136, %s141
          %s143 = smul.addr %s17, 128
          %s144 = scalar_lea.hbm %s1, %s143
          %s146 = sshll.u32 %s139, 4
          %s147 = int_to_ptr.vmem [resolvable:$true] %s146
          %149 = dma.hbm_to_vmem [thread:$0]  %s144, 128, %s147, %s136
        $region24: #{tpu_custom_call.1} parent=15 // pred_fallthru
          _
      $region16: #{tpu_custom_call.1} parent=5 // pred_fallthru
        _
      %p150 = scmp.le.s32.totalorder 1, %s17
      %p151 = scmp.lt.s32.totalorder %s17, 3
      %p152 = pnand %p150, %p151
      %p153 = pneg %p152
      // Predicated region
      $region25: #{tpu_custom_call.1} parent=5 // pred_check
        _
      $region26: #{tpu_custom_call.1} parent=5 // pred_check_branch
        %155 = sbr.rel (%p152) target = $region28
      $region27: #{tpu_custom_call.1} parent=5 // pred_region
        %s156 = ssub.s32 %s17, 1
        %s157 = sand.u32 %s30, 1
        %s158 = scalar_lea.sflag [#allocation3], %s157
        %s159 = sand.u32 %s30, 1
        %s160 = smul.addr %s159, 8
        %s161 = scalar_lea.vmem [#allocation2], %s160
        // Predicated region
        $region29: #{tpu_custom_call.1} parent=27 // pred_check
          %p162 = pneg %p43
        $region30: #{tpu_custom_call.1} parent=27 // pred_check_branch
          %164 = sbr.rel (%p162) target = $region32
        $region31: #{tpu_custom_call.1} parent=27 // pred_region
          %165 = dma.done %s158, 128
        $region32: #{tpu_custom_call.1} parent=27 // pred_fallthru
          _
        %s166 = sand.u32 %s56, 1
        %s167 = scalar_lea.sflag [#allocation6], %s166
        %s168 = sand.u32 %s56, 1
        %s169 = smul.addr %s168, 8
        %s170 = scalar_lea.vmem [#allocation5], %s169
        // Predicated region
        $region33: #{tpu_custom_call.1} parent=27 // pred_check
          %p171 = pneg %p69
        $region34: #{tpu_custom_call.1} parent=27 // pred_check_branch
          %173 = sbr.rel (%p171) target = $region36
        $region35: #{tpu_custom_call.1} parent=27 // pred_region
          %174 = dma.done %s167, 128
        $region36: #{tpu_custom_call.1} parent=27 // pred_fallthru
          _
        %s175 = sand.u32 %s30, 1
        %s176 = scalar_lea.sflag [#allocation3], %s175
        %s177 = sand.u32 %s30, 1
        %s178 = smul.addr %s177, 8
        %s179 = scalar_lea.vmem [#allocation2], %s178
        %p180 = pneg %p43
        %p181 = pneg %p40
        %s182 = sand.u32 %s56, 1
        %s183 = scalar_lea.sflag [#allocation6], %s182
        %s184 = sand.u32 %s56, 1
        %s185 = smul.addr %s184, 8
        %s186 = scalar_lea.vmem [#allocation5], %s185
        %p187 = pneg %p69
        %p188 = pneg %p66
        %p189 = pneg %p95
        %p190 = pneg %p92
        %s191 = sand.u32 %s82, 1
        %s192 = scalar_lea.sflag [#allocation4], %s191
        %s193 = sand.u32 %s82, 1
        %s194 = smul.addr %s193, 8
        %s195 = scalar_lea.vmem [#allocation7], %s194
        %v196 = vld [vmem:[%s161] sm:$0xff]
        %v197 = vld [vmem:[%s170] sm:$0xff]
        %v198 = vmax.f32 %v196, 1e-12
        %v199 = vmin.f32 %v198, 1.0
        %vm200 = vcmp.ge.f32.partialorder %v197, 2.0
        %v201 = vmax.f32 %v197, 0.0
        %v202 = vmin.f32 %v201, 1.0
        %v203 = vmul.f32 %v202, 0.95
        %v204 = vadd.f32 %v203, 0.025
        %v205 = vlog2.pop %v199
        %v206 = vmul.f32 %v205, 0.6931472
        %v207 = vmax.f32 %v206, -100.0
        %v208 = vsub.f32 1.0, %v199
        %v209 = vlog2.pop %v208
        %v210 = vmul.f32 %v209, 0.6931472
        %v211 = vmax.f32 %v210, -100.0
        %v212 = vsub.f32 %v211, %v207
        %v213 = vmul.f32 %v204, %v212
        %v214 = vsub.f32 %v213, %v211
        %v215 = vsel %vm200, 0.0, %v214
        %216 = vst [vmem:[%s195] sm:$0xff] %v215
        %s217 = sand.u32 %s82, 1
        %s218 = scalar_lea.sflag [#allocation4], %s217
        %s219 = sand.u32 %s82, 1
        %s220 = smul.addr %s219, 8
        %s221 = scalar_lea.vmem [#allocation7], %s220
        // Predicated region
        $region37: #{tpu_custom_call.1} parent=27 // pred_check
          %p222 = pneg %p92
        $region38: #{tpu_custom_call.1} parent=27 // pred_check_branch
          %224 = sbr.rel (%p222) target = $region40
        $region39: #{tpu_custom_call.1} parent=27 // pred_region
          %s226 = ssub.s32 128, 128
          %227 = vsyncadd %s218, %s226
          %s228 = smul.addr %s22, 128
          %s229 = scalar_lea.hbm %s2, %s228
          %s231 = sshll.u32 %s221, 4
          %s232 = int_to_ptr.vmem [resolvable:$true] %s231
          %234 = dma.vmem_to_hbm [thread:$0]  %s232, 128, %s229, %s218
        $region40: #{tpu_custom_call.1} parent=27 // pred_fallthru
          _
      $region28: #{tpu_custom_call.1} parent=5 // pred_fallthru
        _
      %p235 = scmp.le.s32.totalorder 2, %s17
      // Predicated region
      $region41: #{tpu_custom_call.1} parent=5 // pred_check
        %p236 = pneg %p235
      $region42: #{tpu_custom_call.1} parent=5 // pred_check_branch
        %238 = sbr.rel (%p236) target = $region44
      $region43: #{tpu_custom_call.1} parent=5 // pred_region
        %s239 = ssub.s32 %s17, 2
        // Predicated region
        $region45: #{tpu_custom_call.1} parent=43 // pred_check
          %p240 = pneg %p98
        $region46: #{tpu_custom_call.1} parent=43 // pred_check_branch
          %242 = sbr.rel (%p240) target = $region48
        $region47: #{tpu_custom_call.1} parent=43 // pred_region
          %s243 = sand.u32 %s83, 1
          %s244 = scalar_lea.sflag [#allocation4], %s243
          %s245 = sand.u32 %s83, 1
          %s246 = smul.addr %s245, 8
          %s247 = scalar_lea.vmem [#allocation7], %s246
          %248 = dma.done %s244, 128
        $region48: #{tpu_custom_call.1} parent=43 // pred_fallthru
          _
      $region44: #{tpu_custom_call.1} parent=5 // pred_fallthru
        _
    $region6: #{tpu_custom_call.1} parent=1 // loop_footer
      %s21 = sadd.s32 1, %s17
    $region7: #{tpu_custom_call.1} parent=1 // loop_footer_branch
      %16 = sbr.rel target = $region3
    $region8: #{tpu_custom_call.1} parent=1 // loop_exit
      _
    %249 = vsyncpa [#allocation3], 1
    %s250 = scalar_lea.sflag [#allocation3], 1
    %251 = vsyncpa %s250, 1
    %252 = vsyncpa [#allocation6], 1
    %s253 = scalar_lea.sflag [#allocation6], 1
    %254 = vsyncpa %s253, 1
    %255 = vsyncpa [#allocation4], 1
    %s256 = scalar_lea.sflag [#allocation4], 1
    %257 = vsyncpa %s256, 1

</llo_original>
